<compile_context>
chip_gen: v7x
topology: tpu7x:2x2x1
jax: 0.10.0
libtpu: 0.0.40
codegen_flags: <defaults>
</compile_context>

<pallas_src>
import jax
import jax.numpy as jnp
from jax.experimental import pallas as pl
from jax.experimental.pallas import tpu as pltpu

INPUT_SIZE = 3     # num_info
HIDDEN_SIZE = 32
PROJ_SIZE = 3      # proj_size == num_info


def lstm_recurrence_kernel(gx_ref, wcomb_ref, whr_ref, hout_ref):
    """Serial LSTM recurrence over a fully unrolled (static) time loop.

    gx_ref   : (T, B, 4H)  precomputed input gates: x_t @ W_ih^T + b_ih + b_hh
    wcomb_ref: (H, 4H)     W_hr^T @ W_hh^T (projection folded into recurrence)
    whr_ref  : (H, P)      W_hr^T (used once, for the final output projection)
    hout_ref : (B, P)      final projected hidden state h_T
    """
    T, B, _ = gx_ref.shape
    H = HIDDEN_SIZE

    wcomb = wcomb_ref[...]                       # load once, reused every step

    # Recurrent state carried as values (fits in registers), not VMEM scratch.
    c = jnp.zeros((B, H), jnp.float32)
    htilde = jnp.zeros((B, H), jnp.float32)      # un-projected hidden o*tanh(c)

    # T is static -> full Python unroll (state is value-carried, so this also
    # bounds live ranges correctly and gives cross-step scheduling visibility).
    for t in range(T):
        gates = gx_ref[t]                        # (B, 4H), static index
        if t > 0:
            # Single MXU op on the serial dependence chain per step.
            gates = gates + jnp.dot(htilde, wcomb,
                                    preferred_element_type=jnp.float32)

        # PyTorch gate order (i, f, g, o).
        i_g = jax.nn.sigmoid(gates[:, 0 * H:1 * H])
        f_g = jax.nn.sigmoid(gates[:, 1 * H:2 * H])
        g_g = jnp.tanh(gates[:, 2 * H:3 * H])
        o_g = jax.nn.sigmoid(gates[:, 3 * H:4 * H])

        if t == 0:
            c = i_g * g_g                        # c_0 = 0 => forget term vanishes
        else:
            c = f_g * c + i_g * g_g
        htilde = o_g * jnp.tanh(c)

    # One projection at the very end produces PyTorch's h_n (proj_size = P).
    hout_ref[...] = jnp.dot(htilde, whr_ref[...],
                            preferred_element_type=jnp.float32)


def lstm_forward(x_bti, w_ih, w_hh, w_hr, b_ih, b_hh):
    """x_bti: (B, T, I) float32. Returns h_n of shape (1, B, P)."""
    B, T, I = x_bti.shape
    H, P = HIDDEN_SIZE, PROJ_SIZE
    assert I == INPUT_SIZE

    f32 = jnp.float32
    x = x_bti.astype(f32)
    w_ih = w_ih.astype(f32)            # (4H, I)
    w_hh = w_hh.astype(f32)            # (4H, P)
    w_hr = w_hr.astype(f32)            # (P, H)
    bias = (b_ih + b_hh).astype(f32)   # (4H,)

    # (1) Hoisted input projection: one batched (B*T, I) x (I, 4H) matmul +
    #     bias, laid out time-major as (T, B, 4H).
    gx = jnp.einsum('bti,gi->tbg', x, w_ih) + bias[None, None, :]

    # (2) Fold the output projection into the recurrent weight:
    #       W_hh @ h_{t-1} = W_hh @ (W_hr @ htilde_{t-1}) = (W_hh W_hr) @ htilde
    #     right-multiply form: htilde @ (W_hr^T W_hh^T), shape (H, 4H).
    wcomb = w_hr.T @ w_hh.T            # (H, 4H)
    whr_t = w_hr.T                     # (H, P)

    # All operands fit trivially in VMEM on v5e/v6e/v7x at these shapes, so a
    # single ungridded call is used. For large B/T: add a "parallel" batch grid
    # axis (v7x second TensorCore) and time-chunked BlockSpecs for gx.
    h_n = pl.pallas_call(
        lstm_recurrence_kernel,
        out_shape=jax.ShapeDtypeStruct((B, P), f32),
        in_specs=[pl.BlockSpec(memory_space=pltpu.MemorySpace.VMEM)] * 3,
        out_specs=pl.BlockSpec(memory_space=pltpu.MemorySpace.VMEM),
    )(gx.astype(f32), wcomb, whr_t)

    return h_n.reshape(1, B, P)


def lstm_reference(x_bti, w_ih, w_hh, w_hr, b_ih, b_hh):
    """Pure-JAX reference of PyTorch nn.LSTM(proj_size>0) forward."""
    B, T, I = x_bti.shape
    H, P = HIDDEN_SIZE, PROJ_SIZE
    h = jnp.zeros((B, P), jnp.float32)
    c = jnp.zeros((B, H), jnp.float32)
    for t in range(T):
        x_t = x_bti[:, t, :]
        gates = x_t @ w_ih.T + h @ w_hh.T + b_ih + b_hh
        i_g = jax.nn.sigmoid(gates[:, 0 * H:1 * H])
        f_g = jax.nn.sigmoid(gates[:, 1 * H:2 * H])
        g_g = jnp.tanh(gates[:, 2 * H:3 * H])
        o_g = jax.nn.sigmoid(gates[:, 3 * H:4 * H])
        c = f_g * c + i_g * g_g
        h = (o_g * jnp.tanh(c)) @ w_hr.T
    return h.reshape(1, B, P)


if __name__ == "__main__":
    key = jax.random.PRNGKey(0)
    B, T, I, H, P = 2, 8, INPUT_SIZE, HIDDEN_SIZE, PROJ_SIZE

    ks = jax.random.split(key, 7)
    bound = 1.0 / jnp.sqrt(jnp.float32(H))   # PyTorch default init range
    x = jax.random.normal(ks[0], (B, T, I), jnp.float32)
    w_ih = jax.random.uniform(ks[1], (4 * H, I), jnp.float32, -bound, bound)
    w_hh = jax.random.uniform(ks[2], (4 * H, P), jnp.float32, -bound, bound)
    w_hr = jax.random.uniform(ks[3], (P, H), jnp.float32, -bound, bound)
    b_ih = jax.random.uniform(ks[4], (4 * H,), jnp.float32, -bound, bound)
    b_hh = jax.random.uniform(ks[5], (4 * H,), jnp.float32, -bound, bound)

    h_n = lstm_forward(x, w_ih, w_hh, w_hr, b_ih, b_hh)
    jax.block_until_ready(h_n)

    ref = lstm_reference(x, w_ih, w_hh, w_hr, b_ih, b_hh)
    assert h_n.shape == (1, B, P)
    assert jnp.allclose(h_n, ref, atol=2e-5, rtol=2e-5)

    print("KERNEL_OK")
</pallas_src>

<mosaic_0001>
module attributes {stable_mosaic.version = 11 : i64} {
  func.func @lstm_recurrence_kernel(%arg0: memref<8x2x128xf32, #tpu.memory_space<vmem>>, %arg1: memref<32x128xf32, #tpu.memory_space<vmem>>, %arg2: memref<32x3xf32, #tpu.memory_space<vmem>>, %arg3: memref<2x3xf32, #tpu.memory_space<vmem>>) attributes {dimension_semantics = [], scalar_prefetch = 0 : i64, scratch_operands = 0 : i64, tpu.core_type = #tpu.core_type<tc>} {
    %c0 = arith.constant 0 : index
    %c0_0 = arith.constant 0 : index
    %0 = vector.load %arg1[%c0, %c0_0] : memref<32x128xf32, #tpu.memory_space<vmem>>, vector<32x128xf32>
    %c0_1 = arith.constant 0 : index
    %c0_2 = arith.constant 0 : index
    %c0_3 = arith.constant 0 : index
    %1 = vector.load %arg0[%c0_1, %c0_2, %c0_3] : memref<8x2x128xf32, #tpu.memory_space<vmem>>, vector<1x2x128xf32>
    %2 = vector.shape_cast %1 : vector<1x2x128xf32> to vector<2x128xf32>
    %3 = vector.extract_strided_slice %2 {offsets = [0, 0], sizes = [2, 32], strides = [1, 1]} : vector<2x128xf32> to vector<2x32xf32>
    %4 = arith.negf %3 : vector<2x32xf32>
    %5 = math.exp %4 : vector<2x32xf32>
    %cst = arith.constant 1.000000e+00 : f32
    %6 = vector.broadcast %cst : f32 to vector<2x32xf32>
    %7 = arith.addf %6, %5 : vector<2x32xf32>
    %8 = arith.divf %6, %7 : vector<2x32xf32>
    %9 = vector.extract_strided_slice %2 {offsets = [0, 64], sizes = [2, 32], strides = [1, 1]} : vector<2x128xf32> to vector<2x32xf32>
    %10 = math.tanh %9 : vector<2x32xf32>
    %11 = vector.extract_strided_slice %2 {offsets = [0, 96], sizes = [2, 32], strides = [1, 1]} : vector<2x128xf32> to vector<2x32xf32>
    %12 = arith.negf %11 : vector<2x32xf32>
    %13 = math.exp %12 : vector<2x32xf32>
    %cst_4 = arith.constant 1.000000e+00 : f32
    %14 = vector.broadcast %cst_4 : f32 to vector<2x32xf32>
    %15 = arith.addf %14, %13 : vector<2x32xf32>
    %16 = arith.divf %14, %15 : vector<2x32xf32>
    %17 = arith.mulf %8, %10 : vector<2x32xf32>
    %18 = math.tanh %17 : vector<2x32xf32>
    %19 = arith.mulf %16, %18 : vector<2x32xf32>
    %c1 = arith.constant 1 : index
    %c0_5 = arith.constant 0 : index
    %c0_6 = arith.constant 0 : index
    %20 = vector.load %arg0[%c1, %c0_5, %c0_6] : memref<8x2x128xf32, #tpu.memory_space<vmem>>, vector<1x2x128xf32>
    %21 = vector.shape_cast %20 : vector<1x2x128xf32> to vector<2x128xf32>
    %cst_7 = arith.constant dense<0.000000e+00> : vector<2x128xf32>
    %22 = tpu.matmul %19, %0, %cst_7 {dimension_numbers = #tpu.dot_dimension_numbers<[1], [0], [0], [1], [0, 0, 1, 1], [], []>} : vector<2x32xf32>, vector<32x128xf32>, vector<2x128xf32> -> vector<2x128xf32>
    %23 = arith.addf %21, %22 : vector<2x128xf32>
    %24 = vector.extract_strided_slice %23 {offsets = [0, 0], sizes = [2, 32], strides = [1, 1]} : vector<2x128xf32> to vector<2x32xf32>
    %25 = arith.negf %24 : vector<2x32xf32>
    %26 = math.exp %25 : vector<2x32xf32>
    %cst_8 = arith.constant 1.000000e+00 : f32
    %27 = vector.broadcast %cst_8 : f32 to vector<2x32xf32>
    %28 = arith.addf %27, %26 : vector<2x32xf32>
    %29 = arith.divf %27, %28 : vector<2x32xf32>
    %30 = vector.extract_strided_slice %23 {offsets = [0, 32], sizes = [2, 32], strides = [1, 1]} : vector<2x128xf32> to vector<2x32xf32>
    %31 = arith.negf %30 : vector<2x32xf32>
    %32 = math.exp %31 : vector<2x32xf32>
    %cst_9 = arith.constant 1.000000e+00 : f32
    %33 = vector.broadcast %cst_9 : f32 to vector<2x32xf32>
    %34 = arith.addf %33, %32 : vector<2x32xf32>
    %35 = arith.divf %33, %34 : vector<2x32xf32>
    %36 = vector.extract_strided_slice %23 {offsets = [0, 64], sizes = [2, 32], strides = [1, 1]} : vector<2x128xf32> to vector<2x32xf32>
    %37 = math.tanh %36 : vector<2x32xf32>
    %38 = vector.extract_strided_slice %23 {offsets = [0, 96], sizes = [2, 32], strides = [1, 1]} : vector<2x128xf32> to vector<2x32xf32>
    %39 = arith.negf %38 : vector<2x32xf32>
    %40 = math.exp %39 : vector<2x32xf32>
    %cst_10 = arith.constant 1.000000e+00 : f32
    %41 = vector.broadcast %cst_10 : f32 to vector<2x32xf32>
    %42 = arith.addf %41, %40 : vector<2x32xf32>
    %43 = arith.divf %41, %42 : vector<2x32xf32>
    %44 = arith.mulf %35, %17 : vector<2x32xf32>
    %45 = arith.mulf %29, %37 : vector<2x32xf32>
    %46 = arith.addf %44, %45 : vector<2x32xf32>
    %47 = math.tanh %46 : vector<2x32xf32>
    %48 = arith.mulf %43, %47 : vector<2x32xf32>
    %c2 = arith.constant 2 : index
    %c0_11 = arith.constant 0 : index
    %c0_12 = arith.constant 0 : index
    %49 = vector.load %arg0[%c2, %c0_11, %c0_12] : memref<8x2x128xf32, #tpu.memory_space<vmem>>, vector<1x2x128xf32>
    %50 = vector.shape_cast %49 : vector<1x2x128xf32> to vector<2x128xf32>
    %cst_13 = arith.constant dense<0.000000e+00> : vector<2x128xf32>
    %51 = tpu.matmul %48, %0, %cst_13 {dimension_numbers = #tpu.dot_dimension_numbers<[1], [0], [0], [1], [0, 0, 1, 1], [], []>} : vector<2x32xf32>, vector<32x128xf32>, vector<2x128xf32> -> vector<2x128xf32>
    %52 = arith.addf %50, %51 : vector<2x128xf32>
    %53 = vector.extract_strided_slice %52 {offsets = [0, 0], sizes = [2, 32], strides = [1, 1]} : vector<2x128xf32> to vector<2x32xf32>
    %54 = arith.negf %53 : vector<2x32xf32>
    %55 = math.exp %54 : vector<2x32xf32>
    %cst_14 = arith.constant 1.000000e+00 : f32
    %56 = vector.broadcast %cst_14 : f32 to vector<2x32xf32>
    %57 = arith.addf %56, %55 : vector<2x32xf32>
    %58 = arith.divf %56, %57 : vector<2x32xf32>
    %59 = vector.extract_strided_slice %52 {offsets = [0, 32], sizes = [2, 32], strides = [1, 1]} : vector<2x128xf32> to vector<2x32xf32>
    %60 = arith.negf %59 : vector<2x32xf32>
    %61 = math.exp %60 : vector<2x32xf32>
    %cst_15 = arith.constant 1.000000e+00 : f32
    %62 = vector.broadcast %cst_15 : f32 to vector<2x32xf32>
    %63 = arith.addf %62, %61 : vector<2x32xf32>
    %64 = arith.divf %62, %63 : vector<2x32xf32>
    %65 = vector.extract_strided_slice %52 {offsets = [0, 64], sizes = [2, 32], strides = [1, 1]} : vector<2x128xf32> to vector<2x32xf32>
    %66 = math.tanh %65 : vector<2x32xf32>
    %67 = vector.extract_strided_slice %52 {offsets = [0, 96], sizes = [2, 32], strides = [1, 1]} : vector<2x128xf32> to vector<2x32xf32>
    %68 = arith.negf %67 : vector<2x32xf32>
    %69 = math.exp %68 : vector<2x32xf32>
    %cst_16 = arith.constant 1.000000e+00 : f32
    %70 = vector.broadcast %cst_16 : f32 to vector<2x32xf32>
    %71 = arith.addf %70, %69 : vector<2x32xf32>
    %72 = arith.divf %70, %71 : vector<2x32xf32>
    %73 = arith.mulf %64, %46 : vector<2x32xf32>
    %74 = arith.mulf %58, %66 : vector<2x32xf32>
    %75 = arith.addf %73, %74 : vector<2x32xf32>
    %76 = math.tanh %75 : vector<2x32xf32>
    %77 = arith.mulf %72, %76 : vector<2x32xf32>
    %c3 = arith.constant 3 : index
    %c0_17 = arith.constant 0 : index
    %c0_18 = arith.constant 0 : index
    %78 = vector.load %arg0[%c3, %c0_17, %c0_18] : memref<8x2x128xf32, #tpu.memory_space<vmem>>, vector<1x2x128xf32>
    %79 = vector.shape_cast %78 : vector<1x2x128xf32> to vector<2x128xf32>
    %cst_19 = arith.constant dense<0.000000e+00> : vector<2x128xf32>
    %80 = tpu.matmul %77, %0, %cst_19 {dimension_numbers = #tpu.dot_dimension_numbers<[1], [0], [0], [1], [0, 0, 1, 1], [], []>} : vector<2x32xf32>, vector<32x128xf32>, vector<2x128xf32> -> vector<2x128xf32>
    %81 = arith.addf %79, %80 : vector<2x128xf32>
    %82 = vector.extract_strided_slice %81 {offsets = [0, 0], sizes = [2, 32], strides = [1, 1]} : vector<2x128xf32> to vector<2x32xf32>
    %83 = arith.negf %82 : vector<2x32xf32>
    %84 = math.exp %83 : vector<2x32xf32>
    %cst_20 = arith.constant 1.000000e+00 : f32
    %85 = vector.broadcast %cst_20 : f32 to vector<2x32xf32>
    %86 = arith.addf %85, %84 : vector<2x32xf32>
    %87 = arith.divf %85, %86 : vector<2x32xf32>
    %88 = vector.extract_strided_slice %81 {offsets = [0, 32], sizes = [2, 32], strides = [1, 1]} : vector<2x128xf32> to vector<2x32xf32>
    %89 = arith.negf %88 : vector<2x32xf32>
    %90 = math.exp %89 : vector<2x32xf32>
    %cst_21 = arith.constant 1.000000e+00 : f32
    %91 = vector.broadcast %cst_21 : f32 to vector<2x32xf32>
    %92 = arith.addf %91, %90 : vector<2x32xf32>
    %93 = arith.divf %91, %92 : vector<2x32xf32>
    %94 = vector.extract_strided_slice %81 {offsets = [0, 64], sizes = [2, 32], strides = [1, 1]} : vector<2x128xf32> to vector<2x32xf32>
    %95 = math.tanh %94 : vector<2x32xf32>
    %96 = vector.extract_strided_slice %81 {offsets = [0, 96], sizes = [2, 32], strides = [1, 1]} : vector<2x128xf32> to vector<2x32xf32>
    %97 = arith.negf %96 : vector<2x32xf32>
    %98 = math.exp %97 : vector<2x32xf32>
    %cst_22 = arith.constant 1.000000e+00 : f32
    %99 = vector.broadcast %cst_22 : f32 to vector<2x32xf32>
    %100 = arith.addf %99, %98 : vector<2x32xf32>
    %101 = arith.divf %99, %100 : vector<2x32xf32>
    %102 = arith.mulf %93, %75 : vector<2x32xf32>
    %103 = arith.mulf %87, %95 : vector<2x32xf32>
    %104 = arith.addf %102, %103 : vector<2x32xf32>
    %105 = math.tanh %104 : vector<2x32xf32>
    %106 = arith.mulf %101, %105 : vector<2x32xf32>
    %c4 = arith.constant 4 : index
    %c0_23 = arith.constant 0 : index
    %c0_24 = arith.constant 0 : index
    %107 = vector.load %arg0[%c4, %c0_23, %c0_24] : memref<8x2x128xf32, #tpu.memory_space<vmem>>, vector<1x2x128xf32>
    %108 = vector.shape_cast %107 : vector<1x2x128xf32> to vector<2x128xf32>
    %cst_25 = arith.constant dense<0.000000e+00> : vector<2x128xf32>
    %109 = tpu.matmul %106, %0, %cst_25 {dimension_numbers = #tpu.dot_dimension_numbers<[1], [0], [0], [1], [0, 0, 1, 1], [], []>} : vector<2x32xf32>, vector<32x128xf32>, vector<2x128xf32> -> vector<2x128xf32>
    %110 = arith.addf %108, %109 : vector<2x128xf32>
    %111 = vector.extract_strided_slice %110 {offsets = [0, 0], sizes = [2, 32], strides = [1, 1]} : vector<2x128xf32> to vector<2x32xf32>
    %112 = arith.negf %111 : vector<2x32xf32>
    %113 = math.exp %112 : vector<2x32xf32>
    %cst_26 = arith.constant 1.000000e+00 : f32
    %114 = vector.broadcast %cst_26 : f32 to vector<2x32xf32>
    %115 = arith.addf %114, %113 : vector<2x32xf32>
    %116 = arith.divf %114, %115 : vector<2x32xf32>
    %117 = vector.extract_strided_slice %110 {offsets = [0, 32], sizes = [2, 32], strides = [1, 1]} : vector<2x128xf32> to vector<2x32xf32>
    %118 = arith.negf %117 : vector<2x32xf32>
    %119 = math.exp %118 : vector<2x32xf32>
    %cst_27 = arith.constant 1.000000e+00 : f32
    %120 = vector.broadcast %cst_27 : f32 to vector<2x32xf32>
    %121 = arith.addf %120, %119 : vector<2x32xf32>
    %122 = arith.divf %120, %121 : vector<2x32xf32>
    %123 = vector.extract_strided_slice %110 {offsets = [0, 64], sizes = [2, 32], strides = [1, 1]} : vector<2x128xf32> to vector<2x32xf32>
    %124 = math.tanh %123 : vector<2x32xf32>
    %125 = vector.extract_strided_slice %110 {offsets = [0, 96], sizes = [2, 32], strides = [1, 1]} : vector<2x128xf32> to vector<2x32xf32>
    %126 = arith.negf %125 : vector<2x32xf32>
    %127 = math.exp %126 : vector<2x32xf32>
    %cst_28 = arith.constant 1.000000e+00 : f32
    %128 = vector.broadcast %cst_28 : f32 to vector<2x32xf32>
    %129 = arith.addf %128, %127 : vector<2x32xf32>
    %130 = arith.divf %128, %129 : vector<2x32xf32>
    %131 = arith.mulf %122, %104 : vector<2x32xf32>
    %132 = arith.mulf %116, %124 : vector<2x32xf32>
    %133 = arith.addf %131, %132 : vector<2x32xf32>
    %134 = math.tanh %133 : vector<2x32xf32>
    %135 = arith.mulf %130, %134 : vector<2x32xf32>
    %c5 = arith.constant 5 : index
    %c0_29 = arith.constant 0 : index
    %c0_30 = arith.constant 0 : index
    %136 = vector.load %arg0[%c5, %c0_29, %c0_30] : memref<8x2x128xf32, #tpu.memory_space<vmem>>, vector<1x2x128xf32>
    %137 = vector.shape_cast %136 : vector<1x2x128xf32> to vector<2x128xf32>
    %cst_31 = arith.constant dense<0.000000e+00> : vector<2x128xf32>
    %138 = tpu.matmul %135, %0, %cst_31 {dimension_numbers = #tpu.dot_dimension_numbers<[1], [0], [0], [1], [0, 0, 1, 1], [], []>} : vector<2x32xf32>, vector<32x128xf32>, vector<2x128xf32> -> vector<2x128xf32>
    %139 = arith.addf %137, %138 : vector<2x128xf32>
    %140 = vector.extract_strided_slice %139 {offsets = [0, 0], sizes = [2, 32], strides = [1, 1]} : vector<2x128xf32> to vector<2x32xf32>
    %141 = arith.negf %140 : vector<2x32xf32>
    %142 = math.exp %141 : vector<2x32xf32>
    %cst_32 = arith.constant 1.000000e+00 : f32
    %143 = vector.broadcast %cst_32 : f32 to vector<2x32xf32>
    %144 = arith.addf %143, %142 : vector<2x32xf32>
    %145 = arith.divf %143, %144 : vector<2x32xf32>
    %146 = vector.extract_strided_slice %139 {offsets = [0, 32], sizes = [2, 32], strides = [1, 1]} : vector<2x128xf32> to vector<2x32xf32>
    %147 = arith.negf %146 : vector<2x32xf32>
    %148 = math.exp %147 : vector<2x32xf32>
    %cst_33 = arith.constant 1.000000e+00 : f32
    %149 = vector.broadcast %cst_33 : f32 to vector<2x32xf32>
    %150 = arith.addf %149, %148 : vector<2x32xf32>
    %151 = arith.divf %149, %150 : vector<2x32xf32>
    %152 = vector.extract_strided_slice %139 {offsets = [0, 64], sizes = [2, 32], strides = [1, 1]} : vector<2x128xf32> to vector<2x32xf32>
    %153 = math.tanh %152 : vector<2x32xf32>
    %154 = vector.extract_strided_slice %139 {offsets = [0, 96], sizes = [2, 32], strides = [1, 1]} : vector<2x128xf32> to vector<2x32xf32>
    %155 = arith.negf %154 : vector<2x32xf32>
    %156 = math.exp %155 : vector<2x32xf32>
    %cst_34 = arith.constant 1.000000e+00 : f32
    %157 = vector.broadcast %cst_34 : f32 to vector<2x32xf32>
    %158 = arith.addf %157, %156 : vector<2x32xf32>
    %159 = arith.divf %157, %158 : vector<2x32xf32>
    %160 = arith.mulf %151, %133 : vector<2x32xf32>
    %161 = arith.mulf %145, %153 : vector<2x32xf32>
    %162 = arith.addf %160, %161 : vector<2x32xf32>
    %163 = math.tanh %162 : vector<2x32xf32>
    %164 = arith.mulf %159, %163 : vector<2x32xf32>
    %c6 = arith.constant 6 : index
    %c0_35 = arith.constant 0 : index
    %c0_36 = arith.constant 0 : index
    %165 = vector.load %arg0[%c6, %c0_35, %c0_36] : memref<8x2x128xf32, #tpu.memory_space<vmem>>, vector<1x2x128xf32>
    %166 = vector.shape_cast %165 : vector<1x2x128xf32> to vector<2x128xf32>
    %cst_37 = arith.constant dense<0.000000e+00> : vector<2x128xf32>
    %167 = tpu.matmul %164, %0, %cst_37 {dimension_numbers = #tpu.dot_dimension_numbers<[1], [0], [0], [1], [0, 0, 1, 1], [], []>} : vector<2x32xf32>, vector<32x128xf32>, vector<2x128xf32> -> vector<2x128xf32>
    %168 = arith.addf %166, %167 : vector<2x128xf32>
    %169 = vector.extract_strided_slice %168 {offsets = [0, 0], sizes = [2, 32], strides = [1, 1]} : vector<2x128xf32> to vector<2x32xf32>
    %170 = arith.negf %169 : vector<2x32xf32>
    %171 = math.exp %170 : vector<2x32xf32>
    %cst_38 = arith.constant 1.000000e+00 : f32
    %172 = vector.broadcast %cst_38 : f32 to vector<2x32xf32>
    %173 = arith.addf %172, %171 : vector<2x32xf32>
    %174 = arith.divf %172, %173 : vector<2x32xf32>
    %175 = vector.extract_strided_slice %168 {offsets = [0, 32], sizes = [2, 32], strides = [1, 1]} : vector<2x128xf32> to vector<2x32xf32>
    %176 = arith.negf %175 : vector<2x32xf32>
    %177 = math.exp %176 : vector<2x32xf32>
    %cst_39 = arith.constant 1.000000e+00 : f32
    %178 = vector.broadcast %cst_39 : f32 to vector<2x32xf32>
    %179 = arith.addf %178, %177 : vector<2x32xf32>
    %180 = arith.divf %178, %179 : vector<2x32xf32>
    %181 = vector.extract_strided_slice %168 {offsets = [0, 64], sizes = [2, 32], strides = [1, 1]} : vector<2x128xf32> to vector<2x32xf32>
    %182 = math.tanh %181 : vector<2x32xf32>
    %183 = vector.extract_strided_slice %168 {offsets = [0, 96], sizes = [2, 32], strides = [1, 1]} : vector<2x128xf32> to vector<2x32xf32>
    %184 = arith.negf %183 : vector<2x32xf32>
    %185 = math.exp %184 : vector<2x32xf32>
    %cst_40 = arith.constant 1.000000e+00 : f32
    %186 = vector.broadcast %cst_40 : f32 to vector<2x32xf32>
    %187 = arith.addf %186, %185 : vector<2x32xf32>
    %188 = arith.divf %186, %187 : vector<2x32xf32>
    %189 = arith.mulf %180, %162 : vector<2x32xf32>
    %190 = arith.mulf %174, %182 : vector<2x32xf32>
    %191 = arith.addf %189, %190 : vector<2x32xf32>
    %192 = math.tanh %191 : vector<2x32xf32>
    %193 = arith.mulf %188, %192 : vector<2x32xf32>
    %c7 = arith.constant 7 : index
    %c0_41 = arith.constant 0 : index
    %c0_42 = arith.constant 0 : index
    %194 = vector.load %arg0[%c7, %c0_41, %c0_42] : memref<8x2x128xf32, #tpu.memory_space<vmem>>, vector<1x2x128xf32>
    %195 = vector.shape_cast %194 : vector<1x2x128xf32> to vector<2x128xf32>
    %cst_43 = arith.constant dense<0.000000e+00> : vector<2x128xf32>
    %196 = tpu.matmul %193, %0, %cst_43 {dimension_numbers = #tpu.dot_dimension_numbers<[1], [0], [0], [1], [0, 0, 1, 1], [], []>} : vector<2x32xf32>, vector<32x128xf32>, vector<2x128xf32> -> vector<2x128xf32>
    %197 = arith.addf %195, %196 : vector<2x128xf32>
    %198 = vector.extract_strided_slice %197 {offsets = [0, 0], sizes = [2, 32], strides = [1, 1]} : vector<2x128xf32> to vector<2x32xf32>
    %199 = arith.negf %198 : vector<2x32xf32>
    %200 = math.exp %199 : vector<2x32xf32>
    %cst_44 = arith.constant 1.000000e+00 : f32
    %201 = vector.broadcast %cst_44 : f32 to vector<2x32xf32>
    %202 = arith.addf %201, %200 : vector<2x32xf32>
    %203 = arith.divf %201, %202 : vector<2x32xf32>
    %204 = vector.extract_strided_slice %197 {offsets = [0, 32], sizes = [2, 32], strides = [1, 1]} : vector<2x128xf32> to vector<2x32xf32>
    %205 = arith.negf %204 : vector<2x32xf32>
    %206 = math.exp %205 : vector<2x32xf32>
    %cst_45 = arith.constant 1.000000e+00 : f32
    %207 = vector.broadcast %cst_45 : f32 to vector<2x32xf32>
    %208 = arith.addf %207, %206 : vector<2x32xf32>
    %209 = arith.divf %207, %208 : vector<2x32xf32>
    %210 = vector.extract_strided_slice %197 {offsets = [0, 64], sizes = [2, 32], strides = [1, 1]} : vector<2x128xf32> to vector<2x32xf32>
    %211 = math.tanh %210 : vector<2x32xf32>
    %212 = vector.extract_strided_slice %197 {offsets = [0, 96], sizes = [2, 32], strides = [1, 1]} : vector<2x128xf32> to vector<2x32xf32>
    %213 = arith.negf %212 : vector<2x32xf32>
    %214 = math.exp %213 : vector<2x32xf32>
    %cst_46 = arith.constant 1.000000e+00 : f32
    %215 = vector.broadcast %cst_46 : f32 to vector<2x32xf32>
    %216 = arith.addf %215, %214 : vector<2x32xf32>
    %217 = arith.divf %215, %216 : vector<2x32xf32>
    %218 = arith.mulf %209, %191 : vector<2x32xf32>
    %219 = arith.mulf %203, %211 : vector<2x32xf32>
    %220 = arith.addf %218, %219 : vector<2x32xf32>
    %221 = math.tanh %220 : vector<2x32xf32>
    %222 = arith.mulf %217, %221 : vector<2x32xf32>
    %c0_47 = arith.constant 0 : index
    %c0_48 = arith.constant 0 : index
    %223 = vector.load %arg2[%c0_47, %c0_48] : memref<32x3xf32, #tpu.memory_space<vmem>>, vector<32x3xf32>
    %cst_49 = arith.constant dense<0.000000e+00> : vector<2x3xf32>
    %224 = tpu.matmul %222, %223, %cst_49 {dimension_numbers = #tpu.dot_dimension_numbers<[1], [0], [0], [1], [0, 0, 1, 1], [], []>} : vector<2x32xf32>, vector<32x3xf32>, vector<2x3xf32> -> vector<2x3xf32>
    %c0_50 = arith.constant 0 : index
    %c0_51 = arith.constant 0 : index
    %225 = vector.load %arg3[%c0_50, %c0_51] : memref<2x3xf32, #tpu.memory_space<vmem>>, vector<2x3xf32>
    tpu.vector_store %arg3[%c0_50, %c0_51], %224 {strides = array<i32>} : memref<2x3xf32, #tpu.memory_space<vmem>>, vector<2x3xf32>,
    return
  }
}

</mosaic_0001>

<llo_original>
// kernel: tpu_custom_call.1
$region0: #{tpu_custom_call.1}
  #allocation0 [shape = 'u32[]', space=smem, size = 0x4, offset = 0x4, fixed_abs, tag = 'smem constant byte address 0x4 - core index']
  #allocation1 [shape = 'u32[144,128]{1,0:T(1,128)}', space=vmem, size = 0x12000, scoped, tag = 'internal scratch']
  %s0 = inlined_call_operand.hbm [shape: f32[8,2,128], index: 0, kind: input, shape index: {}]
  %s1 = inlined_call_operand.vmem [shape: f32[32,128], index: 1, kind: input, shape index: {}]
  %s2 = inlined_call_operand.vmem [shape: f32[32,3], index: 2, kind: input, shape index: {}]
  %s3 = inlined_call_operand.hbm [shape: f32[2,3], index: 3, kind: output, shape index: {}]
  %s4 = sld [smem:[#allocation0]]
  $region26: #{tpu_custom_call.1} parent=0
    _
  %s6 = ssub.s32 1, %s4
  %s7 = scalar_select 0, %s6, %s4
  $region1: #{tpu_custom_call.1} parent=0
    #allocation2 [shape = 'u8[8192]{0}', space=vmem, size = 0x2000, scoped, tag = 'input window, operand 0, single buffered']
    #allocation3 [shape = 's32[1]{0}', space=sflag, size = 0x4, scoped, tag = 'scoped memory for tpu_custom_call.1']
    #allocation4 [shape = 's32[1]{0}', space=sflag, size = 0x4, scoped, tag = 'scoped memory for tpu_custom_call.1']
    #allocation5 [shape = 'u8[1024]{0}', space=vmem, size = 0x400, scoped, tag = 'output window, operand 0, single buffered']
    %8 = vsyncpa [#allocation3], 0
    %9 = vsyncpa [#allocation4], 0
    // Predicated region
    $region2: #{tpu_custom_call.1} parent=1 // pred_check
      _
    $region3: #{tpu_custom_call.1} parent=1 // pred_check_branch
      %11 = sbr.rel (0) target = $region5
    $region4: #{tpu_custom_call.1} parent=1 // pred_region
      %s13 = ssub.s32 256, 256
      %14 = vsyncadd [#allocation3], %s13
      %s15 = sshll.u32 [#allocation2], 4
      %s16 = int_to_ptr.vmem [resolvable:$true] %s15
      %21 = dma.hbm_to_vmem [thread:$0]  %s0, 256, %s16, [#allocation3], 32, 32, 2
    $region5: #{tpu_custom_call.1} parent=1 // pred_fallthru
      _
    // Predicated region
    $region6: #{tpu_custom_call.1} parent=1 // pred_check
      _
    $region7: #{tpu_custom_call.1} parent=1 // pred_check_branch
      %23 = sbr.rel (0) target = $region9
    $region8: #{tpu_custom_call.1} parent=1 // pred_region
      _
    $region9: #{tpu_custom_call.1} parent=1 // pred_fallthru
      _
    // Predicated region
    $region10: #{tpu_custom_call.1} parent=1 // pred_check
      _
    $region11: #{tpu_custom_call.1} parent=1 // pred_check_branch
      %25 = sbr.rel (0) target = $region13
    $region12: #{tpu_custom_call.1} parent=1 // pred_region
      _
    $region13: #{tpu_custom_call.1} parent=1 // pred_fallthru
      _
    // Predicated region
    $region14: #{tpu_custom_call.1} parent=1 // pred_check
      _
    $region15: #{tpu_custom_call.1} parent=1 // pred_check_branch
      %27 = sbr.rel (0) target = $region17
    $region16: #{tpu_custom_call.1} parent=1 // pred_region
      %28 = dma.done [#allocation3], 256
    $region17: #{tpu_custom_call.1} parent=1 // pred_fallthru
      _
    %v29 = vld [vmem:[%s1] sm:$0xff]
    %v30 = vld [vmem:[%s1 + $0x8] sm:$0xff]
    %v31 = vld [vmem:[%s1 + $0x10] sm:$0xff]
    %v32 = vld [vmem:[%s1 + $0x18] sm:$0xff]
    %v33 = vld [vmem:[#allocation2] sm:$0x3]
    %v34 = vxor.u32 %v33, 2147483648
    %v35 = vmul.f32 %v34, 1.442695
    %v36 = vpow.pop %v35
    %v37 = vadd.f32 %v36, 1.0
    %v38 = vrcp.pop %v37
    %v39 = vmul.f32 1.0, %v38
    %v40 = vtanh.pop %v33
    %42 = vrot.lane.b32.xlu0 %v40, 64
    %v43 = vpop.permute.xlu0 %42
    %v45 = vmul.f32 %v39, %v43
    %v46 = vtanh.pop %v45
    %48 = vrot.lane.b32.xlu0 %v46, 96
    %v49 = vpop.permute.xlu0 %48
    %v51 = vmul.f32 %v39, %v49
    %s52 = scalar_lea.vmem [#allocation2], 2
    %v53 = vld [vmem:[%s52] sm:$0x3]
    %55 = vrot.lane.b32.xlu0 %v51, 32
    %v56 = vpop.permute.xlu0 %55
    %vm57 = vcmask 261120
    %v58 = vsel %vm57, %v56, 0
    %60 = vmatprep.subr.mxu0 0.0
    %61 = vmatpush1.msra.mxu0 %v29
    %62 = vmatprep.subr.mxu0 0.0
    %63 = vmatpush1.msra.mxu0 %v30
    %64 = vmatprep.subr.mxu0 0.0
    %65 = vmatpush1.msra.mxu0 %v31
    %66 = vmatprep.subr.mxu0 0.0
    %67 = vmatpush1.msra.mxu0 %v32
    %68 = vmatprep.subr.mxu0 0.0
    %69 = vmatpush1.msra.mxu0 0.0
    %70 = vmatprep.subr.mxu0 0.0
    %71 = vmatpush1.msra.mxu0 0.0
    %72 = vmatprep.subr.mxu0 0.0
    %73 = vmatpush1.msra.mxu0 0.0
    %74 = vmatprep.subr.mxu0 0.0
    %75 = vmatpush1.msra.mxu0 0.0
    %76 = vmatprep.subr.mxu0 0.0
    %77 = vmatpush1.msra.mxu0 0.0
    %78 = vmatprep.subr.mxu0 0.0
    %79 = vmatpush1.msra.mxu0 0.0
    %80 = vmatprep.subr.mxu0 0.0
    %81 = vmatpush1.msra.mxu0 0.0
    %82 = vmatprep.subr.mxu0 0.0
    %83 = vmatpush1.msra.mxu0 0.0
    %84 = vmatprep.subr.mxu0 0.0
    %85 = vmatpush1.msra.mxu0 0.0
    %86 = vmatprep.subr.mxu0 0.0
    %87 = vmatpush1.msra.mxu0 0.0
    %88 = vmatprep.subr.mxu0 0.0
    %89 = vmatpush1.msra.mxu0 0.0
    %90 = vmatprep.subr.mxu0 0.0
    %91 = vmatpush1.msra.mxu0 0.0
    %92 = vmatprep.subr.mxu0 0.0
    %93 = vmatpush1.msra.mxu0 0.0
    %94 = vmatprep.subr.mxu0 0.0
    %95 = vmatpush1.msra.mxu0 0.0
    %96 = vmatprep.subr.mxu0 0.0
    %97 = vmatpush1.msra.mxu0 0.0
    %98 = vmatprep.subr.mxu0 0.0
    %99 = vmatpush1.msra.mxu0 0.0
    %100 = vmatprep.subr.mxu0 0.0
    %101 = vmatpush1.msra.mxu0 0.0
    %102 = vmatprep.subr.mxu0 0.0
    %103 = vmatpush1.msra.mxu0 0.0
    %104 = vmatprep.subr.mxu0 0.0
    %105 = vmatpush1.msra.mxu0 0.0
    %106 = vmatprep.subr.mxu0 0.0
    %107 = vmatpush1.msra.mxu0 0.0
    %108 = vmatprep.subr.mxu0 0.0
    %109 = vmatpush1.msra.mxu0 0.0
    %110 = vmatprep.subr.mxu0 0.0
    %111 = vmatpush1.msra.mxu0 0.0
    %112 = vmatprep.subr.mxu0 0.0
    %113 = vmatpush1.msra.mxu0 0.0
    %114 = vmatprep.subr.mxu0 0.0
    %115 = vmatpush1.msra.mxu0 0.0
    %116 = vmatprep.subr.mxu0 0.0
    %117 = vmatpush1.msra.mxu0 0.0
    %118 = vmatprep.subr.mxu0 0.0
    %119 = vmatpush1.msra.mxu0 0.0
    %120 = vmatprep.subr.mxu0 0.0
    %121 = vmatpush1.msra.mxu0 0.0
    %122 = vmatprep.subr.mxu0 0.0
    %123 = vmatpush1.msra.mxu0 0.0
    %124 = vmatprep.mubr.f32.mxu0 0.0
    %125 = vmatmul.mubr.f32.gmra.mrb[0].mxu0 %v58
    %v126 = vpop.f32.mrb[0].mxu0
    %v127 = vadd.f32 0.0, %v126
    %v128 = vpop.f32.mrb[0].mxu0
    %129 = vdwg.mxu0
    %v130 = vadd.f32 %v53, %v127
    %v131 = vxor.u32 %v130, 2147483648
    %v132 = vmul.f32 %v131, 1.442695
    %v133 = vpow.pop %v132
    %v134 = vadd.f32 %v133, 1.0
    %v135 = vrcp.pop %v134
    %v136 = vmul.f32 1.0, %v135
    %v137 = vtanh.pop %v130
    %139 = vrot.lane.b32.xlu0 %v45, 32
    %v140 = vpop.permute.xlu0 %139
    %v142 = vmul.f32 %v136, %v140
    %144 = vrot.lane.b32.xlu0 %v137, 64
    %v145 = vpop.permute.xlu0 %144
    %v147 = vmul.f32 %v136, %v145
    %149 = vrot.lane.b32.xlu0 %v147, 32
    %v150 = vpop.permute.xlu0 %149
    %v152 = vadd.f32 %v142, %v150
    %v153 = vtanh.pop %v152
    %155 = vrot.lane.b32.xlu0 %v153, 64
    %v156 = vpop.permute.xlu0 %155
    %v158 = vmul.f32 %v136, %v156
    %s159 = scalar_lea.vmem [#allocation2], 4
    %v160 = vld [vmem:[%s159] sm:$0x3]
    %162 = vrot.lane.b32.xlu0 %v158, 32
    %v163 = vpop.permute.xlu0 %162
    %v164 = vsel %vm57, %v163, 0
    %166 = vmatprep.subr.mxu0 0.0
    %167 = vmatpush1.msra.mxu0 %v29
    %168 = vmatprep.subr.mxu0 0.0
    %169 = vmatpush1.msra.mxu0 %v30
    %170 = vmatprep.subr.mxu0 0.0
    %171 = vmatpush1.msra.mxu0 %v31
    %172 = vmatprep.subr.mxu0 0.0
    %173 = vmatpush1.msra.mxu0 %v32
    %174 = vmatprep.subr.mxu0 0.0
    %175 = vmatpush1.msra.mxu0 0.0
    %176 = vmatprep.subr.mxu0 0.0
    %177 = vmatpush1.msra.mxu0 0.0
    %178 = vmatprep.subr.mxu0 0.0
    %179 = vmatpush1.msra.mxu0 0.0
    %180 = vmatprep.subr.mxu0 0.0
    %181 = vmatpush1.msra.mxu0 0.0
    %182 = vmatprep.subr.mxu0 0.0
    %183 = vmatpush1.msra.mxu0 0.0
    %184 = vmatprep.subr.mxu0 0.0
    %185 = vmatpush1.msra.mxu0 0.0
    %186 = vmatprep.subr.mxu0 0.0
    %187 = vmatpush1.msra.mxu0 0.0
    %188 = vmatprep.subr.mxu0 0.0
    %189 = vmatpush1.msra.mxu0 0.0
    %190 = vmatprep.subr.mxu0 0.0
    %191 = vmatpush1.msra.mxu0 0.0
    %192 = vmatprep.subr.mxu0 0.0
    %193 = vmatpush1.msra.mxu0 0.0
    %194 = vmatprep.subr.mxu0 0.0
    %195 = vmatpush1.msra.mxu0 0.0
    %196 = vmatprep.subr.mxu0 0.0
    %197 = vmatpush1.msra.mxu0 0.0
    %198 = vmatprep.subr.mxu0 0.0
    %199 = vmatpush1.msra.mxu0 0.0
    %200 = vmatprep.subr.mxu0 0.0
    %201 = vmatpush1.msra.mxu0 0.0
    %202 = vmatprep.subr.mxu0 0.0
    %203 = vmatpush1.msra.mxu0 0.0
    %204 = vmatprep.subr.mxu0 0.0
    %205 = vmatpush1.msra.mxu0 0.0
    %206 = vmatprep.subr.mxu0 0.0
    %207 = vmatpush1.msra.mxu0 0.0
    %208 = vmatprep.subr.mxu0 0.0
    %209 = vmatpush1.msra.mxu0 0.0
    %210 = vmatprep.subr.mxu0 0.0
    %211 = vmatpush1.msra.mxu0 0.0
    %212 = vmatprep.subr.mxu0 0.0
    %213 = vmatpush1.msra.mxu0 0.0
    %214 = vmatprep.subr.mxu0 0.0
    %215 = vmatpush1.msra.mxu0 0.0
    %216 = vmatprep.subr.mxu0 0.0
    %217 = vmatpush1.msra.mxu0 0.0
    %218 = vmatprep.subr.mxu0 0.0
    %219 = vmatpush1.msra.mxu0 0.0
    %220 = vmatprep.subr.mxu0 0.0
    %221 = vmatpush1.msra.mxu0 0.0
    %222 = vmatprep.subr.mxu0 0.0
    %223 = vmatpush1.msra.mxu0 0.0
    %224 = vmatprep.subr.mxu0 0.0
    %225 = vmatpush1.msra.mxu0 0.0
    %226 = vmatprep.subr.mxu0 0.0
    %227 = vmatpush1.msra.mxu0 0.0
    %228 = vmatprep.subr.mxu0 0.0
    %229 = vmatpush1.msra.mxu0 0.0
    %230 = vmatprep.mubr.f32.mxu0 0.0
    %231 = vmatmul.mubr.f32.gmra.mrb[0].mxu0 %v164
    %v232 = vpop.f32.mrb[0].mxu0
    %v233 = vadd.f32 0.0, %v232
    %v234 = vpop.f32.mrb[0].mxu0
    %235 = vdwg.mxu0
    %v236 = vadd.f32 %v160, %v233
    %v237 = vxor.u32 %v236, 2147483648
    %v238 = vmul.f32 %v237, 1.442695
    %v239 = vpow.pop %v238
    %v240 = vadd.f32 %v239, 1.0
    %v241 = vrcp.pop %v240
    %v242 = vmul.f32 1.0, %v241
    %v243 = vtanh.pop %v236
    %v244 = vmul.f32 %v242, %v152
    %246 = vrot.lane.b32.xlu0 %v243, 64
    %v247 = vpop.permute.xlu0 %246
    %v249 = vmul.f32 %v242, %v247
    %251 = vrot.lane.b32.xlu0 %v249, 32
    %v252 = vpop.permute.xlu0 %251
    %v254 = vadd.f32 %v244, %v252
    %v255 = vtanh.pop %v254
    %257 = vrot.lane.b32.xlu0 %v255, 64
    %v258 = vpop.permute.xlu0 %257
    %v260 = vmul.f32 %v242, %v258
    %s261 = scalar_lea.vmem [#allocation2], 6
    %v262 = vld [vmem:[%s261] sm:$0x3]
    %264 = vrot.lane.b32.xlu0 %v260, 32
    %v265 = vpop.permute.xlu0 %264
    %v266 = vsel %vm57, %v265, 0
    %268 = vmatprep.subr.mxu0 0.0
    %269 = vmatpush1.msra.mxu0 %v29
    %270 = vmatprep.subr.mxu0 0.0
    %271 = vmatpush1.msra.mxu0 %v30
    %272 = vmatprep.subr.mxu0 0.0
    %273 = vmatpush1.msra.mxu0 %v31
    %274 = vmatprep.subr.mxu0 0.0
    %275 = vmatpush1.msra.mxu0 %v32
    %276 = vmatprep.subr.mxu0 0.0
    %277 = vmatpush1.msra.mxu0 0.0
    %278 = vmatprep.subr.mxu0 0.0
    %279 = vmatpush1.msra.mxu0 0.0
    %280 = vmatprep.subr.mxu0 0.0
    %281 = vmatpush1.msra.mxu0 0.0
    %282 = vmatprep.subr.mxu0 0.0
    %283 = vmatpush1.msra.mxu0 0.0
    %284 = vmatprep.subr.mxu0 0.0
    %285 = vmatpush1.msra.mxu0 0.0
    %286 = vmatprep.subr.mxu0 0.0
    %287 = vmatpush1.msra.mxu0 0.0
    %288 = vmatprep.subr.mxu0 0.0
    %289 = vmatpush1.msra.mxu0 0.0
    %290 = vmatprep.subr.mxu0 0.0
    %291 = vmatpush1.msra.mxu0 0.0
    %292 = vmatprep.subr.mxu0 0.0
    %293 = vmatpush1.msra.mxu0 0.0
    %294 = vmatprep.subr.mxu0 0.0
    %295 = vmatpush1.msra.mxu0 0.0
    %296 = vmatprep.subr.mxu0 0.0
    %297 = vmatpush1.msra.mxu0 0.0
    %298 = vmatprep.subr.mxu0 0.0
    %299 = vmatpush1.msra.mxu0 0.0
    %300 = vmatprep.subr.mxu0 0.0
    %301 = vmatpush1.msra.mxu0 0.0
    %302 = vmatprep.subr.mxu0 0.0
    %303 = vmatpush1.msra.mxu0 0.0
    %304 = vmatprep.subr.mxu0 0.0
    %305 = vmatpush1.msra.mxu0 0.0
    %306 = vmatprep.subr.mxu0 0.0
    %307 = vmatpush1.msra.mxu0 0.0
    %308 = vmatprep.subr.mxu0 0.0
    %309 = vmatpush1.msra.mxu0 0.0
    %310 = vmatprep.subr.mxu0 0.0
    %311 = vmatpush1.msra.mxu0 0.0
    %312 = vmatprep.subr.mxu0 0.0
    %313 = vmatpush1.msra.mxu0 0.0
    %314 = vmatprep.subr.mxu0 0.0
    %315 = vmatpush1.msra.mxu0 0.0
    %316 = vmatprep.subr.mxu0 0.0
    %317 = vmatpush1.msra.mxu0 0.0
    %318 = vmatprep.subr.mxu0 0.0
    %319 = vmatpush1.msra.mxu0 0.0
    %320 = vmatprep.subr.mxu0 0.0
    %321 = vmatpush1.msra.mxu0 0.0
    %322 = vmatprep.subr.mxu0 0.0
    %323 = vmatpush1.msra.mxu0 0.0
    %324 = vmatprep.subr.mxu0 0.0
    %325 = vmatpush1.msra.mxu0 0.0
    %326 = vmatprep.subr.mxu0 0.0
    %327 = vmatpush1.msra.mxu0 0.0
    %328 = vmatprep.subr.mxu0 0.0
    %329 = vmatpush1.msra.mxu0 0.0
    %330 = vmatprep.subr.mxu0 0.0
    %331 = vmatpush1.msra.mxu0 0.0
    %332 = vmatprep.mubr.f32.mxu0 0.0
    %333 = vmatmul.mubr.f32.gmra.mrb[0].mxu0 %v266
    %v334 = vpop.f32.mrb[0].mxu0
    %v335 = vadd.f32 0.0, %v334
    %v336 = vpop.f32.mrb[0].mxu0
    %337 = vdwg.mxu0
    %v338 = vadd.f32 %v262, %v335
    %v339 = vxor.u32 %v338, 2147483648
    %v340 = vmul.f32 %v339, 1.442695
    %v341 = vpow.pop %v340
    %v342 = vadd.f32 %v341, 1.0
    %v343 = vrcp.pop %v342
    %v344 = vmul.f32 1.0, %v343
    %v345 = vtanh.pop %v338
    %v346 = vmul.f32 %v344, %v254
    %348 = vrot.lane.b32.xlu0 %v345, 64
    %v349 = vpop.permute.xlu0 %348
    %v351 = vmul.f32 %v344, %v349
    %353 = vrot.lane.b32.xlu0 %v351, 32
    %v354 = vpop.permute.xlu0 %353
    %v356 = vadd.f32 %v346, %v354
    %v357 = vtanh.pop %v356
    %359 = vrot.lane.b32.xlu0 %v357, 64
    %v360 = vpop.permute.xlu0 %359
    %v362 = vmul.f32 %v344, %v360
    %s363 = scalar_lea.vmem [#allocation2], 8
    %v364 = vld [vmem:[%s363] sm:$0x3]
    %366 = vrot.lane.b32.xlu0 %v362, 32
    %v367 = vpop.permute.xlu0 %366
    %v368 = vsel %vm57, %v367, 0
    %370 = vmatprep.subr.mxu0 0.0
    %371 = vmatpush1.msra.mxu0 %v29
    %372 = vmatprep.subr.mxu0 0.0
    %373 = vmatpush1.msra.mxu0 %v30
    %374 = vmatprep.subr.mxu0 0.0
    %375 = vmatpush1.msra.mxu0 %v31
    %376 = vmatprep.subr.mxu0 0.0
    %377 = vmatpush1.msra.mxu0 %v32
    %378 = vmatprep.subr.mxu0 0.0
    %379 = vmatpush1.msra.mxu0 0.0
    %380 = vmatprep.subr.mxu0 0.0
    %381 = vmatpush1.msra.mxu0 0.0
    %382 = vmatprep.subr.mxu0 0.0
    %383 = vmatpush1.msra.mxu0 0.0
    %384 = vmatprep.subr.mxu0 0.0
    %385 = vmatpush1.msra.mxu0 0.0
    %386 = vmatprep.subr.mxu0 0.0
    %387 = vmatpush1.msra.mxu0 0.0
    %388 = vmatprep.subr.mxu0 0.0
    %389 = vmatpush1.msra.mxu0 0.0
    %390 = vmatprep.subr.mxu0 0.0
    %391 = vmatpush1.msra.mxu0 0.0
    %392 = vmatprep.subr.mxu0 0.0
    %393 = vmatpush1.msra.mxu0 0.0
    %394 = vmatprep.subr.mxu0 0.0
    %395 = vmatpush1.msra.mxu0 0.0
    %396 = vmatprep.subr.mxu0 0.0
    %397 = vmatpush1.msra.mxu0 0.0
    %398 = vmatprep.subr.mxu0 0.0
    %399 = vmatpush1.msra.mxu0 0.0
    %400 = vmatprep.subr.mxu0 0.0
    %401 = vmatpush1.msra.mxu0 0.0
    %402 = vmatprep.subr.mxu0 0.0
    %403 = vmatpush1.msra.mxu0 0.0
    %404 = vmatprep.subr.mxu0 0.0
    %405 = vmatpush1.msra.mxu0 0.0
    %406 = vmatprep.subr.mxu0 0.0
    %407 = vmatpush1.msra.mxu0 0.0
    %408 = vmatprep.subr.mxu0 0.0
    %409 = vmatpush1.msra.mxu0 0.0
    %410 = vmatprep.subr.mxu0 0.0
    %411 = vmatpush1.msra.mxu0 0.0
    %412 = vmatprep.subr.mxu0 0.0
    %413 = vmatpush1.msra.mxu0 0.0
    %414 = vmatprep.subr.mxu0 0.0
    %415 = vmatpush1.msra.mxu0 0.0
    %416 = vmatprep.subr.mxu0 0.0
    %417 = vmatpush1.msra.mxu0 0.0
    %418 = vmatprep.subr.mxu0 0.0
    %419 = vmatpush1.msra.mxu0 0.0
    %420 = vmatprep.subr.mxu0 0.0
    %421 = vmatpush1.msra.mxu0 0.0
    %422 = vmatprep.subr.mxu0 0.0
    %423 = vmatpush1.msra.mxu0 0.0
    %424 = vmatprep.subr.mxu0 0.0
    %425 = vmatpush1.msra.mxu0 0.0
    %426 = vmatprep.subr.mxu0 0.0
    %427 = vmatpush1.msra.mxu0 0.0
    %428 = vmatprep.subr.mxu0 0.0
    %429 = vmatpush1.msra.mxu0 0.0
    %430 = vmatprep.subr.mxu0 0.0
    %431 = vmatpush1.msra.mxu0 0.0
    %432 = vmatprep.subr.mxu0 0.0
    %433 = vmatpush1.msra.mxu0 0.0
    %434 = vmatprep.mubr.f32.mxu0 0.0
    %435 = vmatmul.mubr.f32.gmra.mrb[0].mxu0 %v368
    %v436 = vpop.f32.mrb[0].mxu0
    %v437 = vadd.f32 0.0, %v436
    %v438 = vpop.f32.mrb[0].mxu0
    %439 = vdwg.mxu0
    %v440 = vadd.f32 %v364, %v437
    %v441 = vxor.u32 %v440, 2147483648
    %v442 = vmul.f32 %v441, 1.442695
    %v443 = vpow.pop %v442
    %v444 = vadd.f32 %v443, 1.0
    %v445 = vrcp.pop %v444
    %v446 = vmul.f32 1.0, %v445
    %v447 = vtanh.pop %v440
    %v448 = vmul.f32 %v446, %v356
    %450 = vrot.lane.b32.xlu0 %v447, 64
    %v451 = vpop.permute.xlu0 %450
    %v453 = vmul.f32 %v446, %v451
    %455 = vrot.lane.b32.xlu0 %v453, 32
    %v456 = vpop.permute.xlu0 %455
    %v458 = vadd.f32 %v448, %v456
    %v459 = vtanh.pop %v458
    %461 = vrot.lane.b32.xlu0 %v459, 64
    %v462 = vpop.permute.xlu0 %461
    %v464 = vmul.f32 %v446, %v462
    %s465 = scalar_lea.vmem [#allocation2], 10
    %v466 = vld [vmem:[%s465] sm:$0x3]
    %468 = vrot.lane.b32.xlu0 %v464, 32
    %v469 = vpop.permute.xlu0 %468
    %v470 = vsel %vm57, %v469, 0
    %472 = vmatprep.subr.mxu0 0.0
    %473 = vmatpush1.msra.mxu0 %v29
    %474 = vmatprep.subr.mxu0 0.0
    %475 = vmatpush1.msra.mxu0 %v30
    %476 = vmatprep.subr.mxu0 0.0
    %477 = vmatpush1.msra.mxu0 %v31
    %478 = vmatprep.subr.mxu0 0.0
    %479 = vmatpush1.msra.mxu0 %v32
    %480 = vmatprep.subr.mxu0 0.0
    %481 = vmatpush1.msra.mxu0 0.0
    %482 = vmatprep.subr.mxu0 0.0
    %483 = vmatpush1.msra.mxu0 0.0
    %484 = vmatprep.subr.mxu0 0.0
    %485 = vmatpush1.msra.mxu0 0.0
    %486 = vmatprep.subr.mxu0 0.0
    %487 = vmatpush1.msra.mxu0 0.0
    %488 = vmatprep.subr.mxu0 0.0
    %489 = vmatpush1.msra.mxu0 0.0
    %490 = vmatprep.subr.mxu0 0.0
    %491 = vmatpush1.msra.mxu0 0.0
    %492 = vmatprep.subr.mxu0 0.0
    %493 = vmatpush1.msra.mxu0 0.0
    %494 = vmatprep.subr.mxu0 0.0
    %495 = vmatpush1.msra.mxu0 0.0
    %496 = vmatprep.subr.mxu0 0.0
    %497 = vmatpush1.msra.mxu0 0.0
    %498 = vmatprep.subr.mxu0 0.0
    %499 = vmatpush1.msra.mxu0 0.0
    %500 = vmatprep.subr.mxu0 0.0
    %501 = vmatpush1.msra.mxu0 0.0
    %502 = vmatprep.subr.mxu0 0.0
    %503 = vmatpush1.msra.mxu0 0.0
    %504 = vmatprep.subr.mxu0 0.0
    %505 = vmatpush1.msra.mxu0 0.0
    %506 = vmatprep.subr.mxu0 0.0
    %507 = vmatpush1.msra.mxu0 0.0
    %508 = vmatprep.subr.mxu0 0.0
    %509 = vmatpush1.msra.mxu0 0.0
    %510 = vmatprep.subr.mxu0 0.0
    %511 = vmatpush1.msra.mxu0 0.0
    %512 = vmatprep.subr.mxu0 0.0
    %513 = vmatpush1.msra.mxu0 0.0
    %514 = vmatprep.subr.mxu0 0.0
    %515 = vmatpush1.msra.mxu0 0.0
    %516 = vmatprep.subr.mxu0 0.0
    %517 = vmatpush1.msra.mxu0 0.0
    %518 = vmatprep.subr.mxu0 0.0
    %519 = vmatpush1.msra.mxu0 0.0
    %520 = vmatprep.subr.mxu0 0.0
    %521 = vmatpush1.msra.mxu0 0.0
    %522 = vmatprep.subr.mxu0 0.0
    %523 = vmatpush1.msra.mxu0 0.0
    %524 = vmatprep.subr.mxu0 0.0
    %525 = vmatpush1.msra.mxu0 0.0
    %526 = vmatprep.subr.mxu0 0.0
    %527 = vmatpush1.msra.mxu0 0.0
    %528 = vmatprep.subr.mxu0 0.0
    %529 = vmatpush1.msra.mxu0 0.0
    %530 = vmatprep.subr.mxu0 0.0
    %531 = vmatpush1.msra.mxu0 0.0
    %532 = vmatprep.subr.mxu0 0.0
    %533 = vmatpush1.msra.mxu0 0.0
    %534 = vmatprep.subr.mxu0 0.0
    %535 = vmatpush1.msra.mxu0 0.0
    %536 = vmatprep.mubr.f32.mxu0 0.0
    %537 = vmatmul.mubr.f32.gmra.mrb[0].mxu0 %v470
    %v538 = vpop.f32.mrb[0].mxu0
    %v539 = vadd.f32 0.0, %v538
    %v540 = vpop.f32.mrb[0].mxu0
    %541 = vdwg.mxu0
    %v542 = vadd.f32 %v466, %v539
    %v543 = vxor.u32 %v542, 2147483648
    %v544 = vmul.f32 %v543, 1.442695
    %v545 = vpow.pop %v544
    %v546 = vadd.f32 %v545, 1.0
    %v547 = vrcp.pop %v546
    %v548 = vmul.f32 1.0, %v547
    %v549 = vtanh.pop %v542
    %v550 = vmul.f32 %v548, %v458
    %552 = vrot.lane.b32.xlu0 %v549, 64
    %v553 = vpop.permute.xlu0 %552
    %v555 = vmul.f32 %v548, %v553
    %557 = vrot.lane.b32.xlu0 %v555, 32
    %v558 = vpop.permute.xlu0 %557
    %v560 = vadd.f32 %v550, %v558
    %v561 = vtanh.pop %v560
    %563 = vrot.lane.b32.xlu0 %v561, 64
    %v564 = vpop.permute.xlu0 %563
    %v566 = vmul.f32 %v548, %v564
    %s567 = scalar_lea.vmem [#allocation2], 12
    %v568 = vld [vmem:[%s567] sm:$0x3]
    %570 = vrot.lane.b32.xlu0 %v566, 32
    %v571 = vpop.permute.xlu0 %570
    %v572 = vsel %vm57, %v571, 0
    %574 = vmatprep.subr.mxu0 0.0
    %575 = vmatpush1.msra.mxu0 %v29
    %576 = vmatprep.subr.mxu0 0.0
    %577 = vmatpush1.msra.mxu0 %v30
    %578 = vmatprep.subr.mxu0 0.0
    %579 = vmatpush1.msra.mxu0 %v31
    %580 = vmatprep.subr.mxu0 0.0
    %581 = vmatpush1.msra.mxu0 %v32
    %582 = vmatprep.subr.mxu0 0.0
    %583 = vmatpush1.msra.mxu0 0.0
    %584 = vmatprep.subr.mxu0 0.0
    %585 = vmatpush1.msra.mxu0 0.0
    %586 = vmatprep.subr.mxu0 0.0
    %587 = vmatpush1.msra.mxu0 0.0
    %588 = vmatprep.subr.mxu0 0.0
    %589 = vmatpush1.msra.mxu0 0.0
    %590 = vmatprep.subr.mxu0 0.0
    %591 = vmatpush1.msra.mxu0 0.0
    %592 = vmatprep.subr.mxu0 0.0
    %593 = vmatpush1.msra.mxu0 0.0
    %594 = vmatprep.subr.mxu0 0.0
    %595 = vmatpush1.msra.mxu0 0.0
    %596 = vmatprep.subr.mxu0 0.0
    %597 = vmatpush1.msra.mxu0 0.0
    %598 = vmatprep.subr.mxu0 0.0
    %599 = vmatpush1.msra.mxu0 0.0
    %600 = vmatprep.subr.mxu0 0.0
    %601 = vmatpush1.msra.mxu0 0.0
    %602 = vmatprep.subr.mxu0 0.0
    %603 = vmatpush1.msra.mxu0 0.0
    %604 = vmatprep.subr.mxu0 0.0
    %605 = vmatpush1.msra.mxu0 0.0
    %606 = vmatprep.subr.mxu0 0.0
    %607 = vmatpush1.msra.mxu0 0.0
    %608 = vmatprep.subr.mxu0 0.0
    %609 = vmatpush1.msra.mxu0 0.0
    %610 = vmatprep.subr.mxu0 0.0
    %611 = vmatpush1.msra.mxu0 0.0
    %612 = vmatprep.subr.mxu0 0.0
    %613 = vmatpush1.msra.mxu0 0.0
    %614 = vmatprep.subr.mxu0 0.0
    %615 = vmatpush1.msra.mxu0 0.0
    %616 = vmatprep.subr.mxu0 0.0
    %617 = vmatpush1.msra.mxu0 0.0
    %618 = vmatprep.subr.mxu0 0.0
    %619 = vmatpush1.msra.mxu0 0.0
    %620 = vmatprep.subr.mxu0 0.0
    %621 = vmatpush1.msra.mxu0 0.0
    %622 = vmatprep.subr.mxu0 0.0
    %623 = vmatpush1.msra.mxu0 0.0
    %624 = vmatprep.subr.mxu0 0.0
    %625 = vmatpush1.msra.mxu0 0.0
    %626 = vmatprep.subr.mxu0 0.0
    %627 = vmatpush1.msra.mxu0 0.0
    %628 = vmatprep.subr.mxu0 0.0
    %629 = vmatpush1.msra.mxu0 0.0
    %630 = vmatprep.subr.mxu0 0.0
    %631 = vmatpush1.msra.mxu0 0.0
    %632 = vmatprep.subr.mxu0 0.0
    %633 = vmatpush1.msra.mxu0 0.0
    %634 = vmatprep.subr.mxu0 0.0
    %635 = vmatpush1.msra.mxu0 0.0
    %636 = vmatprep.subr.mxu0 0.0
    %637 = vmatpush1.msra.mxu0 0.0
    %638 = vmatprep.mubr.f32.mxu0 0.0
    %639 = vmatmul.mubr.f32.gmra.mrb[0].mxu0 %v572
    %v640 = vpop.f32.mrb[0].mxu0
    %v641 = vadd.f32 0.0, %v640
    %v642 = vpop.f32.mrb[0].mxu0
    %643 = vdwg.mxu0
    %v644 = vadd.f32 %v568, %v641
    %v645 = vxor.u32 %v644, 2147483648
    %v646 = vmul.f32 %v645, 1.442695
    %v647 = vpow.pop %v646
    %v648 = vadd.f32 %v647, 1.0
    %v649 = vrcp.pop %v648
    %v650 = vmul.f32 1.0, %v649
    %v651 = vtanh.pop %v644
    %v652 = vmul.f32 %v650, %v560
    %654 = vrot.lane.b32.xlu0 %v651, 64
    %v655 = vpop.permute.xlu0 %654
    %v657 = vmul.f32 %v650, %v655
    %659 = vrot.lane.b32.xlu0 %v657, 32
    %v660 = vpop.permute.xlu0 %659
    %v662 = vadd.f32 %v652, %v660
    %v663 = vtanh.pop %v662
    %665 = vrot.lane.b32.xlu0 %v663, 64
    %v666 = vpop.permute.xlu0 %665
    %v668 = vmul.f32 %v650, %v666
    %s669 = scalar_lea.vmem [#allocation2], 14
    %v670 = vld [vmem:[%s669] sm:$0x3]
    %672 = vrot.lane.b32.xlu0 %v668, 32
    %v673 = vpop.permute.xlu0 %672
    %v674 = vsel %vm57, %v673, 0
    %676 = vmatprep.subr.mxu0 0.0
    %677 = vmatpush1.msra.mxu0 %v29
    %678 = vmatprep.subr.mxu0 0.0
    %679 = vmatpush1.msra.mxu0 %v30
    %680 = vmatprep.subr.mxu0 0.0
    %681 = vmatpush1.msra.mxu0 %v31
    %682 = vmatprep.subr.mxu0 0.0
    %683 = vmatpush1.msra.mxu0 %v32
    %684 = vmatprep.subr.mxu0 0.0
    %685 = vmatpush1.msra.mxu0 0.0
    %686 = vmatprep.subr.mxu0 0.0
    %687 = vmatpush1.msra.mxu0 0.0
    %688 = vmatprep.subr.mxu0 0.0
    %689 = vmatpush1.msra.mxu0 0.0
    %690 = vmatprep.subr.mxu0 0.0
    %691 = vmatpush1.msra.mxu0 0.0
    %692 = vmatprep.subr.mxu0 0.0
    %693 = vmatpush1.msra.mxu0 0.0
    %694 = vmatprep.subr.mxu0 0.0
    %695 = vmatpush1.msra.mxu0 0.0
    %696 = vmatprep.subr.mxu0 0.0
    %697 = vmatpush1.msra.mxu0 0.0
    %698 = vmatprep.subr.mxu0 0.0
    %699 = vmatpush1.msra.mxu0 0.0
    %700 = vmatprep.subr.mxu0 0.0
    %701 = vmatpush1.msra.mxu0 0.0
    %702 = vmatprep.subr.mxu0 0.0
    %703 = vmatpush1.msra.mxu0 0.0
    %704 = vmatprep.subr.mxu0 0.0
    %705 = vmatpush1.msra.mxu0 0.0
    %706 = vmatprep.subr.mxu0 0.0
    %707 = vmatpush1.msra.mxu0 0.0
    %708 = vmatprep.subr.mxu0 0.0
    %709 = vmatpush1.msra.mxu0 0.0
    %710 = vmatprep.subr.mxu0 0.0
    %711 = vmatpush1.msra.mxu0 0.0
    %712 = vmatprep.subr.mxu0 0.0
    %713 = vmatpush1.msra.mxu0 0.0
    %714 = vmatprep.subr.mxu0 0.0
    %715 = vmatpush1.msra.mxu0 0.0
    %716 = vmatprep.subr.mxu0 0.0
    %717 = vmatpush1.msra.mxu0 0.0
    %718 = vmatprep.subr.mxu0 0.0
    %719 = vmatpush1.msra.mxu0 0.0
    %720 = vmatprep.subr.mxu0 0.0
    %721 = vmatpush1.msra.mxu0 0.0
    %722 = vmatprep.subr.mxu0 0.0
    %723 = vmatpush1.msra.mxu0 0.0
    %724 = vmatprep.subr.mxu0 0.0
    %725 = vmatpush1.msra.mxu0 0.0
    %726 = vmatprep.subr.mxu0 0.0
    %727 = vmatpush1.msra.mxu0 0.0
    %728 = vmatprep.subr.mxu0 0.0
    %729 = vmatpush1.msra.mxu0 0.0
    %730 = vmatprep.subr.mxu0 0.0
    %731 = vmatpush1.msra.mxu0 0.0
    %732 = vmatprep.subr.mxu0 0.0
    %733 = vmatpush1.msra.mxu0 0.0
    %734 = vmatprep.subr.mxu0 0.0
    %735 = vmatpush1.msra.mxu0 0.0
    %736 = vmatprep.subr.mxu0 0.0
    %737 = vmatpush1.msra.mxu0 0.0
    %738 = vmatprep.subr.mxu0 0.0
    %739 = vmatpush1.msra.mxu0 0.0
    %740 = vmatprep.mubr.f32.mxu0 0.0
    %741 = vmatmul.mubr.f32.gmra.mrb[0].mxu0 %v674
    %v742 = vpop.f32.mrb[0].mxu0
    %v743 = vadd.f32 0.0, %v742
    %v744 = vpop.f32.mrb[0].mxu0
    %745 = vdwg.mxu0
    %v746 = vadd.f32 %v670, %v743
    %v747 = vxor.u32 %v746, 2147483648
    %v748 = vmul.f32 %v747, 1.442695
    %v749 = vpow.pop %v748
    %v750 = vadd.f32 %v749, 1.0
    %v751 = vrcp.pop %v750
    %v752 = vmul.f32 1.0, %v751
    %v753 = vtanh.pop %v746
    %v754 = vmul.f32 %v752, %v662
    %756 = vrot.lane.b32.xlu0 %v753, 64
    %v757 = vpop.permute.xlu0 %756
    %v759 = vmul.f32 %v752, %v757
    %761 = vrot.lane.b32.xlu0 %v759, 32
    %v762 = vpop.permute.xlu0 %761
    %v764 = vadd.f32 %v754, %v762
    %v765 = vtanh.pop %v764
    %767 = vrot.lane.b32.xlu0 %v765, 64
    %v768 = vpop.permute.xlu0 %767
    %v770 = vmul.f32 %v752, %v768
    %v771 = vld [vmem:[%s2] sm:$0xff]
    %v772 = vld [vmem:[%s2 + $0x8] sm:$0xff]
    %v773 = vld [vmem:[%s2 + $0x10] sm:$0xff]
    %v774 = vld [vmem:[%s2 + $0x18] sm:$0xff]
    %776 = vrot.lane.b32.xlu0 %v770, 32
    %v777 = vpop.permute.xlu0 %776
    %v778 = vsel %vm57, %v777, 0
    %780 = vmatprep.subr.mxu0 0.0
    %781 = vmatpush1.msra.mxu0 %v771
    %782 = vmatprep.subr.mxu0 0.0
    %783 = vmatpush1.msra.mxu0 %v772
    %784 = vmatprep.subr.mxu0 0.0
    %785 = vmatpush1.msra.mxu0 %v773
    %786 = vmatprep.subr.mxu0 0.0
    %787 = vmatpush1.msra.mxu0 %v774
    %788 = vmatprep.subr.mxu0 0.0
    %789 = vmatpush1.msra.mxu0 0.0
    %790 = vmatprep.subr.mxu0 0.0
    %791 = vmatpush1.msra.mxu0 0.0
    %792 = vmatprep.subr.mxu0 0.0
    %793 = vmatpush1.msra.mxu0 0.0
    %794 = vmatprep.subr.mxu0 0.0
    %795 = vmatpush1.msra.mxu0 0.0
    %796 = vmatprep.subr.mxu0 0.0
    %797 = vmatpush1.msra.mxu0 0.0
    %798 = vmatprep.subr.mxu0 0.0
    %799 = vmatpush1.msra.mxu0 0.0
    %800 = vmatprep.subr.mxu0 0.0
    %801 = vmatpush1.msra.mxu0 0.0
    %802 = vmatprep.subr.mxu0 0.0
    %803 = vmatpush1.msra.mxu0 0.0
    %804 = vmatprep.subr.mxu0 0.0
    %805 = vmatpush1.msra.mxu0 0.0
    %806 = vmatprep.subr.mxu0 0.0
    %807 = vmatpush1.msra.mxu0 0.0
    %808 = vmatprep.subr.mxu0 0.0
    %809 = vmatpush1.msra.mxu0 0.0
    %810 = vmatprep.subr.mxu0 0.0
    %811 = vmatpush1.msra.mxu0 0.0
    %812 = vmatprep.subr.mxu0 0.0
    %813 = vmatpush1.msra.mxu0 0.0
    %814 = vmatprep.subr.mxu0 0.0
    %815 = vmatpush1.msra.mxu0 0.0
    %816 = vmatprep.subr.mxu0 0.0
    %817 = vmatpush1.msra.mxu0 0.0
    %818 = vmatprep.subr.mxu0 0.0
    %819 = vmatpush1.msra.mxu0 0.0
    %820 = vmatprep.subr.mxu0 0.0
    %821 = vmatpush1.msra.mxu0 0.0
    %822 = vmatprep.subr.mxu0 0.0
    %823 = vmatpush1.msra.mxu0 0.0
    %824 = vmatprep.subr.mxu0 0.0
    %825 = vmatpush1.msra.mxu0 0.0
    %826 = vmatprep.subr.mxu0 0.0
    %827 = vmatpush1.msra.mxu0 0.0
    %828 = vmatprep.subr.mxu0 0.0
    %829 = vmatpush1.msra.mxu0 0.0
    %830 = vmatprep.subr.mxu0 0.0
    %831 = vmatpush1.msra.mxu0 0.0
    %832 = vmatprep.subr.mxu0 0.0
    %833 = vmatpush1.msra.mxu0 0.0
    %834 = vmatprep.subr.mxu0 0.0
    %835 = vmatpush1.msra.mxu0 0.0
    %836 = vmatprep.subr.mxu0 0.0
    %837 = vmatpush1.msra.mxu0 0.0
    %838 = vmatprep.subr.mxu0 0.0
    %839 = vmatpush1.msra.mxu0 0.0
    %840 = vmatprep.subr.mxu0 0.0
    %841 = vmatpush1.msra.mxu0 0.0
    %842 = vmatprep.subr.mxu0 0.0
    %843 = vmatpush1.msra.mxu0 0.0
    %844 = vmatprep.mubr.f32.mxu0 0.0
    %845 = vmatmul.mubr.f32.gmra.mrb[0].mxu0 %v778
    %v846 = vpop.f32.mrb[0].mxu0
    %v847 = vadd.f32 0.0, %v846
    %v848 = vpop.f32.mrb[0].mxu0
    %849 = vdwg.mxu0
    %vm850 = vcmask 17408
    %851 = vst.msk [vmem:[#allocation5] sm:$0x3] %vm850, %v847
    // Predicated region
    $region18: #{tpu_custom_call.1} parent=1 // pred_check
      _
    $region19: #{tpu_custom_call.1} parent=1 // pred_check_branch
      %853 = sbr.rel (0) target = $region21
    $region20: #{tpu_custom_call.1} parent=1 // pred_region
      %s855 = ssub.s32 32, 32
      %856 = vsyncadd [#allocation4], %s855
      %s858 = sshll.u32 [#allocation5], 4
      %s859 = int_to_ptr.vmem [resolvable:$true] %s858
      %861 = dma.vmem_to_hbm [thread:$0]  %s859, 32, %s3, [#allocation4]
    $region21: #{tpu_custom_call.1} parent=1 // pred_fallthru
      _
    // Predicated region
    $region22: #{tpu_custom_call.1} parent=1 // pred_check
      _
    $region23: #{tpu_custom_call.1} parent=1 // pred_check_branch
      %863 = sbr.rel (0) target = $region25
    $region24: #{tpu_custom_call.1} parent=1 // pred_region
      %864 = dma.done [#allocation4], 32
    $region25: #{tpu_custom_call.1} parent=1 // pred_fallthru
      _
    %865 = vsyncpa [#allocation3], 1
    %866 = vsyncpa [#allocation4], 1

</llo_original>
